<compile_context>
chip_gen: v7x
topology: tpu7x:2x2x1
jax: 0.10.0
libtpu: 0.0.40
codegen_flags: <defaults>
</compile_context>

<pallas_src>
import numpy as np
import jax
import jax.numpy as jnp
from jax.experimental import pallas as pl
from jax.experimental.pallas import tpu as pltpu


def build_grid(resolution):
    """Identical to the PyTorch build_grid, but returns a numpy array (1,4,H,W)."""
    ranges = [np.linspace(0.0, 1.0, num=res) for res in resolution]
    grid = np.meshgrid(*ranges, sparse=False, indexing="ij")
    grid = np.stack(grid, axis=0)
    grid = np.reshape(grid, [-1, resolution[0], resolution[1]])
    grid = np.expand_dims(grid, axis=0).astype(np.float32)
    res = np.concatenate([grid, 1.0 - grid], axis=-3)  # (1, 4, H, W)
    return res


def _soft_pos_embed_kernel(grid_ref, w_ref, b_ref, x_ref, o_ref):
    # grid_ref: (4, T), w_ref: (C, 4), b_ref: (C, 1), x_ref/o_ref: (1, C, T)
    g = grid_ref[...]                       # (4, T)  f32
    w = w_ref[...]                          # (C, 4)  f32
    # K=4 contraction done as 4 VPU broadcast multiply-adds instead of a
    # degenerate 4-deep MXU matmul (frees the vex slot, no MRF latency).
    pos = b_ref[...]                        # (C, 1) -> broadcasts over lanes
    pos = pos + w[:, 0:1] * g[0:1, :]
    pos = pos + w[:, 1:2] * g[1:2, :]
    pos = pos + w[:, 2:3] * g[2:3, :]
    pos = pos + w[:, 3:4] * g[3:4, :]       # (C, T) f32
    # Add in f32 for accuracy, cast only the stored result.
    o_ref[0] = (x_ref[0].astype(jnp.float32) + pos).astype(o_ref.dtype)


def _choose_spatial_tile(hw, c, itemsize, max_block_bytes=2 << 20):
    """Largest lane-dense (multiple-of-128) spatial tile whose x block fits the budget."""
    if hw % 128 != 0:
        # Full-extent last dim is always a legal block shape.
        return hw
    t = 128
    while t * 2 <= hw and c * (t * 2) * itemsize <= max_block_bytes:
        t *= 2
    return t


def soft_position_embed(x_nchw, grid_1_4_hw, weight_hid_4, bias_hid):
    """x_nchw: (B, C, H, W); returns (B, C, H, W) = x + dense(grid) (PyTorch semantics)."""
    B, C, H, W = x_nchw.shape
    HW = H * W
    itemsize = jnp.dtype(x_nchw.dtype).itemsize

    # Free layout plumbing only: reshapes, no transposes (no extra HBM passes).
    x_flat = x_nchw.reshape(B, C, HW)                     # (B, C, HW)
    grid_flat = jnp.asarray(grid_1_4_hw,
                            dtype=jnp.float32).reshape(4, HW)   # (4, HW)
    w = weight_hid_4.astype(jnp.float32)                  # (C, 4)
    b = bias_hid.astype(jnp.float32).reshape(C, 1)        # (C, 1)

    T = _choose_spatial_tile(HW, C, itemsize)             # lane-dense spatial tile
    n_t = pl.cdiv(HW, T)

    out_flat = pl.pallas_call(
        _soft_pos_embed_kernel,
        out_shape=jax.ShapeDtypeStruct((B, C, HW), x_nchw.dtype),
        grid_spec=pltpu.PrefetchScalarGridSpec(
            num_scalar_prefetch=0,
            grid=(B, n_t),
            in_specs=[
                pl.BlockSpec((4, T), lambda b_, t: (0, t)),        # grid (per spatial tile)
                pl.BlockSpec((C, 4), lambda b_, t: (0, 0)),        # weight (shared)
                pl.BlockSpec((C, 1), lambda b_, t: (0, 0)),        # bias (shared)
                pl.BlockSpec((1, C, T), lambda b_, t: (b_, 0, t)),  # x tile
            ],
            out_specs=pl.BlockSpec((1, C, T), lambda b_, t: (b_, 0, t)),
        ),
        # x (operand 3) is dead after the call and has identical shape/dtype:
        # reuse its HBM buffer for the output.
        input_output_aliases={3: 0},
        compiler_params=pltpu.CompilerParams(
            dimension_semantics=("parallel", "parallel"),
            # Explicit, conservative scoped-VMEM: well under v7x's 64 MiB
            # physical, above v5e's 16 MiB default so bigger tiles still pipeline.
            vmem_limit_bytes=32 * 1024 * 1024,
        ),
    )(grid_flat, w, b, x_flat)

    return out_flat.reshape(B, C, H, W)


if __name__ == "__main__":
    B, hidden, H, W = 2, 32, 16, 16
    resolution = (H, W)

    key = jax.random.PRNGKey(0)
    kx, kw, kb = jax.random.split(key, 3)

    # Deterministic synthetic parameters (nn.Linear(4, hidden) shapes).
    bound = 1.0 / np.sqrt(4.0)
    weight = jax.random.uniform(kw, (hidden, 4), jnp.float32, -bound, bound)
    bias = jax.random.uniform(kb, (hidden,), jnp.float32, -bound, bound)

    grid_np = build_grid(resolution)                # (1, 4, H, W)
    grid_j = jnp.asarray(grid_np)

    x = jax.random.normal(kx, (B, hidden, H, W), jnp.float32)  # NCHW like PyTorch

    # Pure-JAX reference (computed up front; kernel output may alias x's buffer).
    grid_hwc = jnp.transpose(grid_j, (0, 2, 3, 1))                  # (1, H, W, 4)
    dense_grid = grid_hwc @ weight.T + bias                         # (1, H, W, hidden)
    ref = x + jnp.transpose(dense_grid, (0, 3, 1, 2))               # (B, hidden, H, W)
    ref = jax.block_until_ready(ref)

    out = soft_position_embed(x, grid_j, weight, bias)
    out = jax.block_until_ready(out)

    np.testing.assert_allclose(np.asarray(out), np.asarray(ref), rtol=1e-5, atol=1e-5)

    print("KERNEL_OK")
</pallas_src>

<mosaic_0001>
module attributes {stable_mosaic.version = 11 : i64} {
  func.func @_soft_pos_embed_kernel(%arg0: i32, %arg1: i32, %arg2: memref<4x256xf32, #tpu.memory_space<vmem>>, %arg3: memref<32x4xf32, #tpu.memory_space<vmem>>, %arg4: memref<32x1xf32, #tpu.memory_space<vmem>>, %arg5: memref<1x32x256xf32, #tpu.memory_space<vmem>>, %arg6: memref<1x32x256xf32, #tpu.memory_space<vmem>>) attributes {dimension_semantics = [#tpu.dimension_semantics<parallel>, #tpu.dimension_semantics<parallel>], iteration_bounds = array<i64: 2, 1>, scalar_prefetch = 0 : i64, scratch_operands = 0 : i64, tpu.core_type = #tpu.core_type<tc>, window_params = [{transform_indices = @transform_0, window_bounds = array<i64: 4, 256>}, {pipeline_mode = #tpu.pipeline_mode<synchronous>, transform_indices = @transform_1, window_bounds = array<i64: 32, 4>}, {pipeline_mode = #tpu.pipeline_mode<synchronous>, transform_indices = @transform_2, window_bounds = array<i64: 32, 1>}, {transform_indices = @transform_3, window_bounds = array<i64: 1, 32, 256>}, {transform_indices = @transform_4, window_bounds = array<i64: 1, 32, 256>}]} {
    %c0 = arith.constant 0 : index
    %c0_0 = arith.constant 0 : index
    %0 = vector.load %arg2[%c0, %c0_0] : memref<4x256xf32, #tpu.memory_space<vmem>>, vector<4x256xf32>
    %c0_1 = arith.constant 0 : index
    %c0_2 = arith.constant 0 : index
    %1 = vector.load %arg3[%c0_1, %c0_2] : memref<32x4xf32, #tpu.memory_space<vmem>>, vector<32x4xf32>
    %c0_3 = arith.constant 0 : index
    %c0_4 = arith.constant 0 : index
    %2 = vector.load %arg4[%c0_3, %c0_4] : memref<32x1xf32, #tpu.memory_space<vmem>>, vector<32x1xf32>
    %3 = vector.extract_strided_slice %1 {offsets = [0, 0], sizes = [32, 1], strides = [1, 1]} : vector<32x4xf32> to vector<32x1xf32>
    %4 = vector.extract_strided_slice %0 {offsets = [0, 0], sizes = [1, 256], strides = [1, 1]} : vector<4x256xf32> to vector<1x256xf32>
    %5 = vector.broadcast %3 : vector<32x1xf32> to vector<32x256xf32>
    %6 = vector.broadcast %4 : vector<1x256xf32> to vector<32x256xf32>
    %7 = arith.mulf %5, %6 : vector<32x256xf32>
    %8 = vector.broadcast %2 : vector<32x1xf32> to vector<32x256xf32>
    %9 = arith.addf %8, %7 : vector<32x256xf32>
    %10 = vector.extract_strided_slice %1 {offsets = [0, 1], sizes = [32, 1], strides = [1, 1]} : vector<32x4xf32> to vector<32x1xf32>
    %11 = vector.extract_strided_slice %0 {offsets = [1, 0], sizes = [1, 256], strides = [1, 1]} : vector<4x256xf32> to vector<1x256xf32>
    %12 = vector.broadcast %10 : vector<32x1xf32> to vector<32x256xf32>
    %13 = vector.broadcast %11 : vector<1x256xf32> to vector<32x256xf32>
    %14 = arith.mulf %12, %13 : vector<32x256xf32>
    %15 = arith.addf %9, %14 : vector<32x256xf32>
    %16 = vector.extract_strided_slice %1 {offsets = [0, 2], sizes = [32, 1], strides = [1, 1]} : vector<32x4xf32> to vector<32x1xf32>
    %17 = vector.extract_strided_slice %0 {offsets = [2, 0], sizes = [1, 256], strides = [1, 1]} : vector<4x256xf32> to vector<1x256xf32>
    %18 = vector.broadcast %16 : vector<32x1xf32> to vector<32x256xf32>
    %19 = vector.broadcast %17 : vector<1x256xf32> to vector<32x256xf32>
    %20 = arith.mulf %18, %19 : vector<32x256xf32>
    %21 = arith.addf %15, %20 : vector<32x256xf32>
    %22 = vector.extract_strided_slice %1 {offsets = [0, 3], sizes = [32, 1], strides = [1, 1]} : vector<32x4xf32> to vector<32x1xf32>
    %23 = vector.extract_strided_slice %0 {offsets = [3, 0], sizes = [1, 256], strides = [1, 1]} : vector<4x256xf32> to vector<1x256xf32>
    %24 = vector.broadcast %22 : vector<32x1xf32> to vector<32x256xf32>
    %25 = vector.broadcast %23 : vector<1x256xf32> to vector<32x256xf32>
    %26 = arith.mulf %24, %25 : vector<32x256xf32>
    %27 = arith.addf %21, %26 : vector<32x256xf32>
    %c0_5 = arith.constant 0 : index
    %c0_6 = arith.constant 0 : index
    %c0_7 = arith.constant 0 : index
    %28 = vector.load %arg5[%c0_5, %c0_6, %c0_7] : memref<1x32x256xf32, #tpu.memory_space<vmem>>, vector<1x32x256xf32>
    %29 = vector.shape_cast %28 : vector<1x32x256xf32> to vector<32x256xf32>
    %30 = arith.addf %29, %27 : vector<32x256xf32>
    %c0_8 = arith.constant 0 : index
    %c0_9 = arith.constant 0 : index
    %c0_10 = arith.constant 0 : index
    %31 = vector.load %arg6[%c0_8, %c0_9, %c0_10] : memref<1x32x256xf32, #tpu.memory_space<vmem>>, vector<1x32x256xf32>
    %32 = vector.shape_cast %31 : vector<1x32x256xf32> to vector<32x256xf32>
    %33 = vector.shape_cast %30 : vector<32x256xf32> to vector<1x32x256xf32>
    tpu.vector_store %arg6[%c0_8, %c0_9, %c0_10], %33 {strides = array<i32>} : memref<1x32x256xf32, #tpu.memory_space<vmem>>, vector<1x32x256xf32>,
    return
  }
  func.func @transform_0(%arg0: i32, %arg1: i32) -> (i32, i32) {
    %c0_i32 = arith.constant 0 : i32
    %c0_i32_0 = arith.constant 0 : i32
    return %c0_i32, %arg1 : i32, i32
  }
  func.func @transform_1(%arg0: i32, %arg1: i32) -> (i32, i32) {
    %c0_i32 = arith.constant 0 : i32
    %c0_i32_0 = arith.constant 0 : i32
    %c0_i32_1 = arith.constant 0 : i32
    return %c0_i32, %c0_i32_0 : i32, i32
  }
  func.func @transform_2(%arg0: i32, %arg1: i32) -> (i32, i32) {
    %c0_i32 = arith.constant 0 : i32
    %c0_i32_0 = arith.constant 0 : i32
    %c0_i32_1 = arith.constant 0 : i32
    return %c0_i32, %c0_i32_0 : i32, i32
  }
  func.func @transform_3(%arg0: i32, %arg1: i32) -> (i32, i32, i32) {
    %c0_i32 = arith.constant 0 : i32
    %c0_i32_0 = arith.constant 0 : i32
    return %arg0, %c0_i32, %arg1 : i32, i32, i32
  }
  func.func @transform_4(%arg0: i32, %arg1: i32) -> (i32, i32, i32) {
    %c0_i32 = arith.constant 0 : i32
    %c0_i32_0 = arith.constant 0 : i32
    return %arg0, %c0_i32, %arg1 : i32, i32, i32
  }
}

</mosaic_0001>

<llo_original>
// kernel: tpu_custom_call.1
$region0: #{tpu_custom_call.1}
  #allocation0 [shape = 'u32[]', space=smem, size = 0x4, offset = 0x4, fixed_abs, tag = 'smem constant byte address 0x4 - core index']
  #allocation1 [shape = 'u32[144,128]{1,0:T(1,128)}', space=vmem, size = 0x12000, scoped, tag = 'internal scratch']
  %s0 = inlined_call_operand.vmem [shape: f32[4,256], index: 0, kind: input, shape index: {}]
  %s1 = inlined_call_operand.vmem [shape: f32[32,4], index: 1, kind: input, shape index: {}]
  %s2 = inlined_call_operand.vmem [shape: f32[32,1], index: 2, kind: input, shape index: {}]
  %s3 = inlined_call_operand.hbm [shape: f32[2,32,256], index: 3, kind: input, shape index: {}, may-alias: {3,4}]
  %s4 = inlined_call_operand.hbm [shape: f32[2,32,256], index: 4, kind: output, shape index: {}, may-alias: {3,4}]
  %s5 = sld [smem:[#allocation0]]
  $region53: #{tpu_custom_call.1} parent=0
    _
  %s7 = ssub.s32 1, %s5
  %s8 = scalar_select 0, %s7, %s5
  $region1: #{tpu_custom_call.1} parent=0
    #allocation2 [shape = 'u8[65536]{0}', space=vmem, size = 0x10000, scoped, tag = 'input window, operand 3']
    #allocation3 [shape = 's32[2]{0}', space=sflag, size = 0x8, scoped, tag = 'scoped memory for tpu_custom_call.1']
    #allocation4 [shape = 's32[2]{0}', space=sflag, size = 0x8, scoped, tag = 'scoped memory for tpu_custom_call.1']
    #allocation5 [shape = 'u8[65536]{0}', space=vmem, size = 0x10000, scoped, tag = 'output window, operand 0']
    %9 = vsyncpa [#allocation3], 0
    %s10 = scalar_lea.sflag [#allocation3], 1
    %11 = vsyncpa %s10, 0
    %12 = vsyncpa [#allocation4], 0
    %s13 = scalar_lea.sflag [#allocation4], 1
    %14 = vsyncpa %s13, 0
    loop: start=0, step=1, limit=4
    $region2: #{tpu_custom_call.1} parent=1 // loop_pre_header
      _
    $region3: #{tpu_custom_call.1} parent=1 // loop_header
      %s16 = sphi 0, %s20
      %p17 = scmp.ge.s32.totalorder %s16, 4
      %s23 = sphi 0, %s35
      %s24 = sphi 0, %s31
      %s25 = sphi 0, %s23
      %s26 = sphi 0, %s24
      %s27 = sphi 0, %s25
      %s28 = sphi 0, %s26
      %s38 = sphi 0, %s40
      %s41 = sphi 0, %s38
      %s42 = sphi 0, %s41
      %s58 = sphi 0, %s42
      %s62 = sphi 0, %s62
      %s64 = sphi 0, %s62
      %s65 = sphi 0, %s64
      %s79 = sphi 0, %s65
      %s83 = sphi 0, %s83
      %s85 = sphi 0, %s83
      %s86 = sphi 0, %s85
      %s100 = sphi 0, %s86
      %s108 = sphi 0, %s110
      %s111 = sphi 0, %s108
      %s112 = sphi 0, %s111
      %s128 = sphi 0, %s112
      %s136 = sphi 0, %s138
      %s139 = sphi 0, %s136
      %s140 = sphi 0, %s139
      %s156 = sphi 0, %s140
    $region4: #{tpu_custom_call.1} parent=1 // loop_header_branch
      %19 = sbr.rel (%p17) target = $region8
    $region5: #{tpu_custom_call.1} parent=1 // loop_body
      %s21 = ssub.s32 %s16, 1
      %s22 = ssub.s32 %s16, 2
      %s29 = sadd.s32 1, %s24
      %p30 = scmp.ge.s32.totalorder %s29, 1
      %s31 = scalar_select %p30, 0, %s29
      %s32 = sadd.s32 1, %s23
      %s33 = scalar_select %p30, %s32, %s23
      %p34 = scmp.ge.s32.totalorder %s33, 2
      %s35 = scalar_select %p34, 0, %s33
      %s36 = ssub.s32 %s24, %s31
      %p37 = scmp.eq.s32.totalorder %s36, 0
      %s39 = sadd.s32 %s38, 1
      %s40 = scalar_select %p37, %s38, %s39
      %p43 = pneg %p37
      %p44 = scmp.eq.s32.totalorder %s16, 1
      %p45 = por %p43, %p44
      %p46 = scmp.ne.s32.totalorder %s38, %s41
      %p47 = scmp.eq.s32.totalorder %s16, 0
      %p48 = por %p46, %p47
      %p49 = scmp.ne.s32.totalorder %s38, %s41
      %p50 = scmp.eq.s32.totalorder %s21, 1
      %p51 = por %p49, %p50
      %p52 = scmp.ne.s32.totalorder %s41, %s42
      %p53 = scmp.eq.s32.totalorder %s21, 0
      %p54 = por %p52, %p53
      %p55 = scmp.ne.s32.totalorder %s41, %s42
      %p56 = scmp.eq.s32.totalorder %s22, 1
      %p57 = por %p55, %p56
      %p59 = scmp.ne.s32.totalorder %s42, %s58
      %p60 = scmp.eq.s32.totalorder %s22, 0
      %p61 = por %p59, %p60
      %s63 = sadd.s32 %s62, 1
      %p66 = scmp.eq.s32.totalorder %s16, 1
      %p67 = scmp.ne.s32.totalorder %s62, %s64
      %p68 = scmp.eq.s32.totalorder %s16, 0
      %p69 = por %p67, %p68
      %p70 = scmp.ne.s32.totalorder %s62, %s64
      %p71 = scmp.eq.s32.totalorder %s21, 1
      %p72 = por %p70, %p71
      %p73 = scmp.ne.s32.totalorder %s64, %s65
      %p74 = scmp.eq.s32.totalorder %s21, 0
      %p75 = por %p73, %p74
      %p76 = scmp.ne.s32.totalorder %s64, %s65
      %p77 = scmp.eq.s32.totalorder %s22, 1
      %p78 = por %p76, %p77
      %p80 = scmp.ne.s32.totalorder %s65, %s79
      %p81 = scmp.eq.s32.totalorder %s22, 0
      %p82 = por %p80, %p81
      %s84 = sadd.s32 %s83, 1
      %p87 = scmp.eq.s32.totalorder %s16, 1
      %p88 = scmp.ne.s32.totalorder %s83, %s85
      %p89 = scmp.eq.s32.totalorder %s16, 0
      %p90 = por %p88, %p89
      %p91 = scmp.ne.s32.totalorder %s83, %s85
      %p92 = scmp.eq.s32.totalorder %s21, 1
      %p93 = por %p91, %p92
      %p94 = scmp.ne.s32.totalorder %s85, %s86
      %p95 = scmp.eq.s32.totalorder %s21, 0
      %p96 = por %p94, %p95
      %p97 = scmp.ne.s32.totalorder %s85, %s86
      %p98 = scmp.eq.s32.totalorder %s22, 1
      %p99 = por %p97, %p98
      %p101 = scmp.ne.s32.totalorder %s86, %s100
      %p102 = scmp.eq.s32.totalorder %s22, 0
      %p103 = por %p101, %p102
      %s104 = ssub.s32 %s23, %s35
      %s105 = ssub.s32 %s24, %s31
      %s106 = sor.u32 %s104, %s105
      %p107 = scmp.eq.s32.totalorder %s106, 0
      %s109 = sadd.s32 %s108, 1
      %s110 = scalar_select %p107, %s108, %s109
      %p113 = pneg %p107
      %p114 = scmp.eq.s32.totalorder %s16, 1
      %p115 = por %p113, %p114
      %p116 = scmp.ne.s32.totalorder %s108, %s111
      %p117 = scmp.eq.s32.totalorder %s16, 0
      %p118 = por %p116, %p117
      %p119 = scmp.ne.s32.totalorder %s108, %s111
      %p120 = scmp.eq.s32.totalorder %s21, 1
      %p121 = por %p119, %p120
      %p122 = scmp.ne.s32.totalorder %s111, %s112
      %p123 = scmp.eq.s32.totalorder %s21, 0
      %p124 = por %p122, %p123
      %p125 = scmp.ne.s32.totalorder %s111, %s112
      %p126 = scmp.eq.s32.totalorder %s22, 1
      %p127 = por %p125, %p126
      %p129 = scmp.ne.s32.totalorder %s112, %s128
      %p130 = scmp.eq.s32.totalorder %s22, 0
      %p131 = por %p129, %p130
      %s132 = ssub.s32 %s23, %s35
      %s133 = ssub.s32 %s24, %s31
      %s134 = sor.u32 %s132, %s133
      %p135 = scmp.eq.s32.totalorder %s134, 0
      %s137 = sadd.s32 %s136, 1
      %s138 = scalar_select %p135, %s136, %s137
      %p141 = pneg %p135
      %p142 = scmp.eq.s32.totalorder %s16, 1
      %p143 = por %p141, %p142
      %p144 = scmp.ne.s32.totalorder %s136, %s139
      %p145 = scmp.eq.s32.totalorder %s16, 0
      %p146 = por %p144, %p145
      %p147 = scmp.ne.s32.totalorder %s136, %s139
      %p148 = scmp.eq.s32.totalorder %s21, 1
      %p149 = por %p147, %p148
      %p150 = scmp.ne.s32.totalorder %s139, %s140
      %p151 = scmp.eq.s32.totalorder %s21, 0
      %p152 = por %p150, %p151
      %p153 = scmp.ne.s32.totalorder %s139, %s140
      %p154 = scmp.eq.s32.totalorder %s22, 1
      %p155 = por %p153, %p154
      %p157 = scmp.ne.s32.totalorder %s140, %s156
      %p158 = scmp.eq.s32.totalorder %s22, 0
      %p159 = por %p157, %p158
      %p160 = scmp.le.s32.totalorder 1, %s16
      %p161 = scmp.lt.s32.totalorder %s16, 3
      %p162 = pnand %p160, %p161
      %p163 = pneg %p162
      // Predicated region
      $region9: #{tpu_custom_call.1} parent=5 // pred_check
        _
      $region10: #{tpu_custom_call.1} parent=5 // pred_check_branch
        %165 = sbr.rel (%p162) target = $region12
      $region11: #{tpu_custom_call.1} parent=5 // pred_region
        %s166 = ssub.s32 %s16, 1
        // Predicated region
        $region13: #{tpu_custom_call.1} parent=11 // pred_check
          %p167 = pneg %p54
        $region14: #{tpu_custom_call.1} parent=11 // pred_check_branch
          %169 = sbr.rel (%p167) target = $region16
        $region15: #{tpu_custom_call.1} parent=11 // pred_region
          %s170 = smul.u32 2, %s26
          %p171 = scmp.lt.s32.totalorder %s170, 1
          %s172 = scalar_select %p171, %s170, 1
          %s173 = smul.addr %s172, 4
          %s174 = scalar_lea.vmem %s0, %s173
          %s175 = smul.u32 2, %s26
        $region16: #{tpu_custom_call.1} parent=11 // pred_fallthru
          _
        // Predicated region
        $region17: #{tpu_custom_call.1} parent=11 // pred_check
          %p176 = pneg %p75
        $region18: #{tpu_custom_call.1} parent=11 // pred_check_branch
          %178 = sbr.rel (%p176) target = $region20
        $region19: #{tpu_custom_call.1} parent=11 // pred_region
          _
        $region20: #{tpu_custom_call.1} parent=11 // pred_fallthru
          _
        // Predicated region
        $region21: #{tpu_custom_call.1} parent=11 // pred_check
          %p179 = pneg %p96
        $region22: #{tpu_custom_call.1} parent=11 // pred_check_branch
          %181 = sbr.rel (%p179) target = $region24
        $region23: #{tpu_custom_call.1} parent=11 // pred_region
          _
        $region24: #{tpu_custom_call.1} parent=11 // pred_fallthru
          _
      $region12: #{tpu_custom_call.1} parent=5 // pred_fallthru
        _
      %p182 = scmp.lt.s32.totalorder %s16, 2
      // Predicated region
      $region25: #{tpu_custom_call.1} parent=5 // pred_check
        %p183 = pneg %p182
      $region26: #{tpu_custom_call.1} parent=5 // pred_check_branch
        %185 = sbr.rel (%p183) target = $region28
      $region27: #{tpu_custom_call.1} parent=5 // pred_region
        // Predicated region
        $region29: #{tpu_custom_call.1} parent=27 // pred_check
          %p186 = pneg %p118
        $region30: #{tpu_custom_call.1} parent=27 // pred_check_branch
          %188 = sbr.rel (%p186) target = $region32
        $region31: #{tpu_custom_call.1} parent=27 // pred_region
          %s189 = sand.u32 %s108, 1
          %s190 = scalar_lea.sflag [#allocation3], %s189
          %s191 = sand.u32 %s108, 1
          %s192 = smul.addr %s191, 64
          %s193 = scalar_lea.vmem [#allocation2], %s192
          %s194 = smul.u32 2, %s24
          %s196 = ssub.s32 1024, 1024
          %197 = vsyncadd %s190, %s196
          %s198 = smul.addr %s23, 8
          %s199 = sadd.s32 %s194, %s198
          %s200 = smul.addr %s199, 128
          %s201 = scalar_lea.hbm %s3, %s200
          %s202 = sshll.u32 %s193, 4
          %s203 = int_to_ptr.vmem [resolvable:$true] %s202
          %208 = dma.hbm_to_vmem [thread:$0]  %s201, 1024, %s203, %s190, 256, 256, 16
        $region32: #{tpu_custom_call.1} parent=27 // pred_fallthru
          _
      $region28: #{tpu_custom_call.1} parent=5 // pred_fallthru
        _
      %p209 = scmp.le.s32.totalorder 1, %s16
      %p210 = scmp.lt.s32.totalorder %s16, 3
      %p211 = pnand %p209, %p210
      %p212 = pneg %p211
      // Predicated region
      $region33: #{tpu_custom_call.1} parent=5 // pred_check
        _
      $region34: #{tpu_custom_call.1} parent=5 // pred_check_branch
        %214 = sbr.rel (%p211) target = $region36
      $region35: #{tpu_custom_call.1} parent=5 // pred_region
        %s215 = ssub.s32 %s16, 1
        %s216 = sand.u32 %s111, 1
        %s217 = scalar_lea.sflag [#allocation3], %s216
        %s218 = sand.u32 %s111, 1
        %s219 = smul.addr %s218, 64
        %s220 = scalar_lea.vmem [#allocation2], %s219
        // Predicated region
        $region37: #{tpu_custom_call.1} parent=35 // pred_check
          %p221 = pneg %p124
        $region38: #{tpu_custom_call.1} parent=35 // pred_check_branch
          %223 = sbr.rel (%p221) target = $region40
        $region39: #{tpu_custom_call.1} parent=35 // pred_region
          %224 = dma.done %s217, 1024
        $region40: #{tpu_custom_call.1} parent=35 // pred_fallthru
          _
        %s225 = smul.u32 2, %s26
        %p226 = scmp.lt.s32.totalorder %s225, 1
        %s227 = scalar_select %p226, %s225, 1
        %s228 = smul.addr %s227, 4
        %s229 = scalar_lea.vmem %s0, %s228
        %p230 = pneg %p54
        %p231 = pneg %p51
        %p232 = pneg %p75
        %p233 = pneg %p72
        %p234 = pneg %p96
        %p235 = pneg %p93
        %s236 = sand.u32 %s111, 1
        %s237 = scalar_lea.sflag [#allocation3], %s236
        %s238 = sand.u32 %s111, 1
        %s239 = smul.addr %s238, 64
        %s240 = scalar_lea.vmem [#allocation2], %s239
        %p241 = pneg %p124
        %p242 = pneg %p121
        %p243 = pneg %p152
        %p244 = pneg %p149
        %s245 = sand.u32 %s139, 1
        %s246 = scalar_lea.sflag [#allocation4], %s245
        %s247 = sand.u32 %s139, 1
        %s248 = smul.addr %s247, 64
        %s249 = scalar_lea.vmem [#allocation5], %s248
        %s250 = smul.u32 2, %s26
        %p251 = scmp.lt.s32.totalorder %s250, 1
        %s252 = scalar_select %p251, %s250, 1
        %s253 = smul.addr %s252, 4
        %s254 = scalar_lea.vmem %s0, %s253
        %s255 = smul.u32 2, %s26
        %s256 = smul.u32 2, %s26
        %s257 = smul.u32 2, %s26
        %v258 = vld [vmem:[%s254] sm:$0xff]
        %v259 = vld [vmem:[%s1] sm:$0xff]
        %v260 = vld [vmem:[%s1 + $0x8] sm:$0xff]
        %v261 = vld [vmem:[%s1 + $0x10] sm:$0xff]
        %v262 = vld [vmem:[%s1 + $0x18] sm:$0xff]
        %v263 = vld [vmem:[%s2] sm:$0xff]
        %v264 = vld [vmem:[%s2 + $0x8] sm:$0xff]
        %v265 = vld [vmem:[%s2 + $0x10] sm:$0xff]
        %v266 = vld [vmem:[%s2 + $0x18] sm:$0xff]
        %268 = vset.pattern.permute.xlu0 0
        %269 = vperm.xlu0 %268, %v259
        %v270 = vpop.permute.xlu0 %269
        %273 = vset.pattern.permute.xlu0 0
        %274 = vperm.xlu0 %273, %v260
        %v275 = vpop.permute.xlu0 %274
        %278 = vset.pattern.permute.xlu0 0
        %279 = vperm.xlu0 %278, %v261
        %v280 = vpop.permute.xlu0 %279
        %283 = vset.pattern.permute.xlu0 0
        %284 = vperm.xlu0 %283, %v262
        %v285 = vpop.permute.xlu0 %284
        %v288 = vlaneseq
        %v289 = vshrl.u32 %v288, 7
        %v290 = vsub.s32 0, %v289
        %v291 = vrot.slane %v258, %v290
        %v292 = vlaneseq
        %v293 = vshrl.u32 %v292, 7
        %v294 = vsub.s32 4, %v293
        %v295 = vrot.slane %v258, %v294
        %v298 = vlaneseq
        %v299 = vshrl.u32 %v298, 7
        %v300 = vsub.s32 0, %v299
        %v301 = vrot.slane %v291, %v300
        %v302 = vlaneseq
        %v303 = vshrl.u32 %v302, 7
        %v304 = vsub.s32 0, %v303
        %v305 = vrot.slane %v295, %v304
        %v306 = vmul.f32 %v270, %v301
        %v307 = vmul.f32 %v270, %v305
        %v308 = vmul.f32 %v275, %v301
        %v309 = vmul.f32 %v275, %v305
        %v310 = vmul.f32 %v280, %v301
        %v311 = vmul.f32 %v280, %v305
        %v312 = vmul.f32 %v285, %v301
        %v313 = vmul.f32 %v285, %v305
        %315 = vset.pattern.permute.xlu0 0
        %316 = vperm.xlu0 %315, %v263
        %v317 = vpop.permute.xlu0 %316
        %320 = vset.pattern.permute.xlu0 0
        %321 = vperm.xlu0 %320, %v264
        %v322 = vpop.permute.xlu0 %321
        %325 = vset.pattern.permute.xlu0 0
        %326 = vperm.xlu0 %325, %v265
        %v327 = vpop.permute.xlu0 %326
        %330 = vset.pattern.permute.xlu0 0
        %331 = vperm.xlu0 %330, %v266
        %v332 = vpop.permute.xlu0 %331
        %v334 = vadd.f32 %v317, %v306
        %v335 = vadd.f32 %v317, %v307
        %v336 = vadd.f32 %v322, %v308
        %v337 = vadd.f32 %v322, %v309
        %v338 = vadd.f32 %v327, %v310
        %v339 = vadd.f32 %v327, %v311
        %v340 = vadd.f32 %v332, %v312
        %v341 = vadd.f32 %v332, %v313
        %342 = vset.pattern.permute.xlu0 1
        %343 = vperm.xlu0 %342, %v259
        %v344 = vpop.permute.xlu0 %343
        %346 = vset.pattern.permute.xlu0 1
        %347 = vperm.xlu0 %346, %v260
        %v348 = vpop.permute.xlu0 %347
        %350 = vset.pattern.permute.xlu0 1
        %351 = vperm.xlu0 %350, %v261
        %v352 = vpop.permute.xlu0 %351
        %354 = vset.pattern.permute.xlu0 1
        %355 = vperm.xlu0 %354, %v262
        %v356 = vpop.permute.xlu0 %355
        %v358 = vlaneseq
        %v359 = vshrl.u32 %v358, 7
        %v360 = vsub.s32 1, %v359
        %v361 = vrot.slane %v258, %v360
        %v362 = vlaneseq
        %v363 = vshrl.u32 %v362, 7
        %v364 = vsub.s32 5, %v363
        %v365 = vrot.slane %v258, %v364
        %v368 = vlaneseq
        %v369 = vshrl.u32 %v368, 7
        %v370 = vsub.s32 1, %v369
        %v371 = vrot.slane %v361, %v370
        %v372 = vlaneseq
        %v373 = vshrl.u32 %v372, 7
        %v374 = vsub.s32 1, %v373
        %v375 = vrot.slane %v365, %v374
        %v376 = vmul.f32 %v344, %v371
        %v377 = vmul.f32 %v344, %v375
        %v378 = vmul.f32 %v348, %v371
        %v379 = vmul.f32 %v348, %v375
        %v380 = vmul.f32 %v352, %v371
        %v381 = vmul.f32 %v352, %v375
        %v382 = vmul.f32 %v356, %v371
        %v383 = vmul.f32 %v356, %v375
        %v384 = vadd.f32 %v334, %v376
        %v385 = vadd.f32 %v335, %v377
        %v386 = vadd.f32 %v336, %v378
        %v387 = vadd.f32 %v337, %v379
        %v388 = vadd.f32 %v338, %v380
        %v389 = vadd.f32 %v339, %v381
        %v390 = vadd.f32 %v340, %v382
        %v391 = vadd.f32 %v341, %v383
        %392 = vset.pattern.permute.xlu0 2
        %393 = vperm.xlu0 %392, %v259
        %v394 = vpop.permute.xlu0 %393
        %396 = vset.pattern.permute.xlu0 2
        %397 = vperm.xlu0 %396, %v260
        %v398 = vpop.permute.xlu0 %397
        %400 = vset.pattern.permute.xlu0 2
        %401 = vperm.xlu0 %400, %v261
        %v402 = vpop.permute.xlu0 %401
        %404 = vset.pattern.permute.xlu0 2
        %405 = vperm.xlu0 %404, %v262
        %v406 = vpop.permute.xlu0 %405
        %v408 = vlaneseq
        %v409 = vshrl.u32 %v408, 7
        %v410 = vsub.s32 2, %v409
        %v411 = vrot.slane %v258, %v410
        %v412 = vlaneseq
        %v413 = vshrl.u32 %v412, 7
        %v414 = vsub.s32 6, %v413
        %v415 = vrot.slane %v258, %v414
        %v418 = vlaneseq
        %v419 = vshrl.u32 %v418, 7
        %v420 = vsub.s32 2, %v419
        %v421 = vrot.slane %v411, %v420
        %v422 = vlaneseq
        %v423 = vshrl.u32 %v422, 7
        %v424 = vsub.s32 2, %v423
        %v425 = vrot.slane %v415, %v424
        %v426 = vmul.f32 %v394, %v421
        %v427 = vmul.f32 %v394, %v425
        %v428 = vmul.f32 %v398, %v421
        %v429 = vmul.f32 %v398, %v425
        %v430 = vmul.f32 %v402, %v421
        %v431 = vmul.f32 %v402, %v425
        %v432 = vmul.f32 %v406, %v421
        %v433 = vmul.f32 %v406, %v425
        %v434 = vadd.f32 %v384, %v426
        %v435 = vadd.f32 %v385, %v427
        %v436 = vadd.f32 %v386, %v428
        %v437 = vadd.f32 %v387, %v429
        %v438 = vadd.f32 %v388, %v430
        %v439 = vadd.f32 %v389, %v431
        %v440 = vadd.f32 %v390, %v432
        %v441 = vadd.f32 %v391, %v433
        %442 = vset.pattern.permute.xlu0 3
        %443 = vperm.xlu0 %442, %v259
        %v444 = vpop.permute.xlu0 %443
        %446 = vset.pattern.permute.xlu0 3
        %447 = vperm.xlu0 %446, %v260
        %v448 = vpop.permute.xlu0 %447
        %450 = vset.pattern.permute.xlu0 3
        %451 = vperm.xlu0 %450, %v261
        %v452 = vpop.permute.xlu0 %451
        %454 = vset.pattern.permute.xlu0 3
        %455 = vperm.xlu0 %454, %v262
        %v456 = vpop.permute.xlu0 %455
        %v458 = vlaneseq
        %v459 = vshrl.u32 %v458, 7
        %v460 = vsub.s32 3, %v459
        %v461 = vrot.slane %v258, %v460
        %v462 = vlaneseq
        %v463 = vshrl.u32 %v462, 7
        %v464 = vsub.s32 7, %v463
        %v465 = vrot.slane %v258, %v464
        %v468 = vlaneseq
        %v469 = vshrl.u32 %v468, 7
        %v470 = vsub.s32 3, %v469
        %v471 = vrot.slane %v461, %v470
        %v472 = vlaneseq
        %v473 = vshrl.u32 %v472, 7
        %v474 = vsub.s32 3, %v473
        %v475 = vrot.slane %v465, %v474
        %v476 = vmul.f32 %v444, %v471
        %v477 = vmul.f32 %v444, %v475
        %v478 = vmul.f32 %v448, %v471
        %v479 = vmul.f32 %v448, %v475
        %v480 = vmul.f32 %v452, %v471
        %v481 = vmul.f32 %v452, %v475
        %v482 = vmul.f32 %v456, %v471
        %v483 = vmul.f32 %v456, %v475
        %v484 = vadd.f32 %v434, %v476
        %v485 = vadd.f32 %v435, %v477
        %v486 = vadd.f32 %v436, %v478
        %v487 = vadd.f32 %v437, %v479
        %v488 = vadd.f32 %v438, %v480
        %v489 = vadd.f32 %v439, %v481
        %v490 = vadd.f32 %v440, %v482
        %v491 = vadd.f32 %v441, %v483
        %v492 = vld [vmem:[%s220] sm:$0xff]
        %v493 = vld [vmem:[%s220 + $0x8] sm:$0xff]
        %v494 = vld [vmem:[%s220 + $0x10] sm:$0xff]
        %v495 = vld [vmem:[%s220 + $0x18] sm:$0xff]
        %v496 = vld [vmem:[%s220 + $0x20] sm:$0xff]
        %v497 = vld [vmem:[%s220 + $0x28] sm:$0xff]
        %v498 = vld [vmem:[%s220 + $0x30] sm:$0xff]
        %v499 = vld [vmem:[%s220 + $0x38] sm:$0xff]
        %v500 = vadd.f32 %v492, %v484
        %v501 = vadd.f32 %v493, %v485
        %v502 = vadd.f32 %v494, %v486
        %v503 = vadd.f32 %v495, %v487
        %v504 = vadd.f32 %v496, %v488
        %v505 = vadd.f32 %v497, %v489
        %v506 = vadd.f32 %v498, %v490
        %v507 = vadd.f32 %v499, %v491
        %508 = vst [vmem:[%s249] sm:$0xff] %v500
        %509 = vst [vmem:[%s249 + $0x8] sm:$0xff] %v501
        %510 = vst [vmem:[%s249 + $0x10] sm:$0xff] %v502
        %511 = vst [vmem:[%s249 + $0x18] sm:$0xff] %v503
        %512 = vst [vmem:[%s249 + $0x20] sm:$0xff] %v504
        %513 = vst [vmem:[%s249 + $0x28] sm:$0xff] %v505
        %514 = vst [vmem:[%s249 + $0x30] sm:$0xff] %v506
        %515 = vst [vmem:[%s249 + $0x38] sm:$0xff] %v507
        %s516 = sand.u32 %s139, 1
        %s517 = scalar_lea.sflag [#allocation4], %s516
        %s518 = sand.u32 %s139, 1
        %s519 = smul.addr %s518, 64
        %s520 = scalar_lea.vmem [#allocation5], %s519
        // Predicated region
        $region41: #{tpu_custom_call.1} parent=35 // pred_check
          %p521 = pneg %p149
        $region42: #{tpu_custom_call.1} parent=35 // pred_check_branch
          %523 = sbr.rel (%p521) target = $region44
        $region43: #{tpu_custom_call.1} parent=35 // pred_region
          %s524 = smul.u32 2, %s26
          %s526 = ssub.s32 1024, 1024
          %527 = vsyncadd %s517, %s526
          %s528 = smul.addr %s25, 8
          %s529 = sadd.s32 %s524, %s528
          %s530 = smul.addr %s529, 128
          %s531 = scalar_lea.hbm %s4, %s530
          %s532 = sshll.u32 %s520, 4
          %s533 = int_to_ptr.vmem [resolvable:$true] %s532
          %538 = dma.vmem_to_hbm [thread:$0]  %s533, 1024, %s531, %s517, 256, 256, 16
        $region44: #{tpu_custom_call.1} parent=35 // pred_fallthru
          _
      $region36: #{tpu_custom_call.1} parent=5 // pred_fallthru
        _
      %p539 = scmp.le.s32.totalorder 2, %s16
      // Predicated region
      $region45: #{tpu_custom_call.1} parent=5 // pred_check
        %p540 = pneg %p539
      $region46: #{tpu_custom_call.1} parent=5 // pred_check_branch
        %542 = sbr.rel (%p540) target = $region48
      $region47: #{tpu_custom_call.1} parent=5 // pred_region
        %s543 = ssub.s32 %s16, 2
        // Predicated region
        $region49: #{tpu_custom_call.1} parent=47 // pred_check
          %p544 = pneg %p155
        $region50: #{tpu_custom_call.1} parent=47 // pred_check_branch
          %546 = sbr.rel (%p544) target = $region52
        $region51: #{tpu_custom_call.1} parent=47 // pred_region
          %s547 = sand.u32 %s140, 1
          %s548 = scalar_lea.sflag [#allocation4], %s547
          %s549 = sand.u32 %s140, 1
          %s550 = smul.addr %s549, 64
          %s551 = scalar_lea.vmem [#allocation5], %s550
          %552 = dma.done %s548, 1024
        $region52: #{tpu_custom_call.1} parent=47 // pred_fallthru
          _
      $region48: #{tpu_custom_call.1} parent=5 // pred_fallthru
        _
    $region6: #{tpu_custom_call.1} parent=1 // loop_footer
      %s20 = sadd.s32 1, %s16
    $region7: #{tpu_custom_call.1} parent=1 // loop_footer_branch
      %15 = sbr.rel target = $region3
    $region8: #{tpu_custom_call.1} parent=1 // loop_exit
      _
    %553 = vsyncpa [#allocation3], 1
    %s554 = scalar_lea.sflag [#allocation3], 1
    %555 = vsyncpa %s554, 1
    %556 = vsyncpa [#allocation4], 1
    %s557 = scalar_lea.sflag [#allocation4], 1
    %558 = vsyncpa %s557, 1

</llo_original>
